<compile_context>
chip_gen: v5e
topology: v5e:2x2
jax: 0.10.0
libtpu: 0.0.40
codegen_flags: <defaults>
</compile_context>

<pallas_src>
import jax
import jax.numpy as jnp
from jax.experimental import pallas as pl
from jax.experimental.pallas import tpu as pltpu


# --------------------------- kernels -------------------------------------

def conv1_kernel(a_ref, x_ref, w1_ref, b1_ref, w2_ref, m_ref, acc_ref):
    """Accumulate (A_hat @ X) over K tiles; epilogue: relu(.@W1 + b1) @ W2."""
    k = pl.program_id(1)

    @pl.when(k == 0)
    def _():
        acc_ref[...] = jnp.zeros_like(acc_ref)

    acc_ref[...] += jnp.dot(a_ref[...], x_ref[...],
                            preferred_element_type=jnp.float32)

    @pl.when(k == pl.num_programs(1) - 1)
    def _():
        h1 = jnp.dot(acc_ref[...].astype(jnp.bfloat16), w1_ref[...],
                     preferred_element_type=jnp.float32) + b1_ref[...]
        h1 = jnp.maximum(h1, 0.0)               # F.relu ; dropout = identity (eval)
        m_ref[...] = jnp.dot(h1.astype(jnp.bfloat16), w2_ref[...],
                             preferred_element_type=jnp.float32
                             ).astype(m_ref.dtype)


def conv2_kernel(a_ref, m_ref, h2_ref, acc_ref):
    """H2 = A_hat @ (H1 @ W2), accumulated over K tiles (b2 folded into fc)."""
    k = pl.program_id(1)

    @pl.when(k == 0)
    def _():
        acc_ref[...] = jnp.zeros_like(acc_ref)

    acc_ref[...] += jnp.dot(a_ref[...], m_ref[...],
                            preferred_element_type=jnp.float32)

    @pl.when(k == pl.num_programs(1) - 1)
    def _():
        h2_ref[...] = acc_ref[...].astype(h2_ref.dtype)


def pool_fc_kernel(p_ref, h2_ref, wfc_ref, bfc_ref, out_ref):
    """out = (P @ H2) @ Wfc + (bfc + b2 @ Wfc)."""
    pooled = jnp.dot(p_ref[...], h2_ref[...],
                     preferred_element_type=jnp.float32)
    out_ref[...] = (jnp.dot(pooled.astype(jnp.bfloat16), wfc_ref[...],
                            preferred_element_type=jnp.float32)
                    + bfc_ref[...])


# --------------------------- wrapper --------------------------------------

def gcn_model_pallas(a_hat, x, w1, b1, w2, b2, pool_mat, wfc, bfc,
                     *, tm=128, tk=128):
    N, F = x.shape
    H1 = w1.shape[1]            # 128
    H2 = w2.shape[1]            # 64
    G = pool_mat.shape[0]
    C = wfc.shape[1]

    # bf16 for everything streamed through / fed to the MXU; f32 accumulation.
    a_bf = a_hat.astype(jnp.bfloat16)
    x_bf = x.astype(jnp.bfloat16)
    w1_bf = w1.astype(jnp.bfloat16)
    w2_bf = w2.astype(jnp.bfloat16)
    p_bf = pool_mat.astype(jnp.bfloat16)
    wfc_bf = wfc.astype(jnp.bfloat16)

    # Fold conv2 bias through mean-pool + fc (rows of P sum to 1).
    bfc_folded = (bfc + b2 @ wfc).astype(jnp.float32)

    tm = min(tm, N)
    tk = min(tk, N)
    assert N % tm == 0 and N % tk == 0, "N must be divisible by the tile sizes"
    grid = (N // tm, N // tk)
    semantics = pltpu.CompilerParams(
        dimension_semantics=("parallel", "arbitrary"))

    # ---- GCNConv1 (+ fused H1 @ W2 projection): M = relu((A@X)@W1+b1) @ W2 --
    m = pl.pallas_call(
        conv1_kernel,
        out_shape=jax.ShapeDtypeStruct((N, H2), jnp.bfloat16),
        grid_spec=pltpu.PrefetchScalarGridSpec(
            num_scalar_prefetch=0,
            grid=grid,
            in_specs=[
                pl.BlockSpec((tm, tk), lambda i, k: (i, k)),   # A_hat tile
                pl.BlockSpec((tk, F), lambda i, k: (k, 0)),    # X tile
                pl.BlockSpec((F, H1), lambda i, k: (0, 0)),    # W1 (resident)
                pl.BlockSpec((1, H1), lambda i, k: (0, 0)),    # b1 (resident)
                pl.BlockSpec((H1, H2), lambda i, k: (0, 0)),   # W2 (resident)
            ],
            out_specs=pl.BlockSpec((tm, H2), lambda i, k: (i, 0)),
            scratch_shapes=[pltpu.VMEM((tm, F), jnp.float32)],
        ),
        compiler_params=semantics,
    )(a_bf, x_bf, w1_bf, b1, w2_bf)

    # ---- GCNConv2 aggregation: H2 = A_hat @ M (bias folded downstream) -----
    h2 = pl.pallas_call(
        conv2_kernel,
        out_shape=jax.ShapeDtypeStruct((N, H2), jnp.bfloat16),
        grid_spec=pltpu.PrefetchScalarGridSpec(
            num_scalar_prefetch=0,
            grid=grid,
            in_specs=[
                pl.BlockSpec((tm, tk), lambda i, k: (i, k)),   # A_hat tile
                pl.BlockSpec((tk, H2), lambda i, k: (k, 0)),   # M tile
            ],
            out_specs=pl.BlockSpec((tm, H2), lambda i, k: (i, 0)),
            scratch_shapes=[pltpu.VMEM((tm, H2), jnp.float32)],
        ),
        compiler_params=semantics,
    )(a_bf, m)

    # ---- global_mean_pool + fc (tiny, gridless) -----------------------------
    vmem = pl.BlockSpec(memory_space=pltpu.MemorySpace.VMEM)
    out = pl.pallas_call(
        pool_fc_kernel,
        out_shape=jax.ShapeDtypeStruct((G, C), jnp.float32),
        in_specs=[vmem] * 4,
        out_specs=vmem,
    )(p_bf, h2, wfc_bf, bfc_folded)
    return out


# ------------------------- plain-JAX glue ---------------------------------

def build_norm_adj(edge_index, num_nodes):
    """Dense D^-1/2 (A + I) D^-1/2 following PyG GCNConv normalization."""
    src, dst = edge_index[0], edge_index[1]
    loop = jnp.arange(num_nodes)
    src = jnp.concatenate([src, loop])
    dst = jnp.concatenate([dst, loop])
    a = jnp.zeros((num_nodes, num_nodes), jnp.float32).at[dst, src].add(1.0)
    deg = a.sum(axis=1)                       # in-degree incl. self loop
    d_inv_sqrt = jnp.where(deg > 0, 1.0 / jnp.sqrt(deg), 0.0)
    return d_inv_sqrt[:, None] * a * d_inv_sqrt[None, :]


def build_pool_matrix(batch, num_graphs):
    onehot = (batch[None, :] == jnp.arange(num_graphs)[:, None]).astype(jnp.float32)
    counts = onehot.sum(axis=1, keepdims=True)
    return onehot / jnp.maximum(counts, 1.0)


def glorot(key, shape):
    fan_in, fan_out = shape[0], shape[1]
    limit = (6.0 / (fan_in + fan_out)) ** 0.5
    return jax.random.uniform(key, shape, jnp.float32, -limit, limit)


def reference_forward(a_hat, x, w1, b1, w2, b2, pool_mat, wfc, bfc):
    h = a_hat @ (x @ w1) + b1
    h = jnp.maximum(h, 0.0)
    h2 = a_hat @ (h @ w2) + b2
    pooled = pool_mat @ h2
    return pooled @ wfc + bfc


if __name__ == "__main__":
    # Small synthetic graph batch: 2 graphs x 128 nodes each (N=256 -> 2x2 grid).
    num_node_features = 16
    num_classes = 8
    nodes_per_graph = 128
    num_graphs = 2
    N = nodes_per_graph * num_graphs
    edges_per_graph = 256

    key = jax.random.PRNGKey(0)
    k_x, k_e1, k_w1, k_w2, k_wfc, k_bfc = jax.random.split(key, 6)

    # Node features.
    x = jax.random.normal(k_x, (N, num_node_features), jnp.float32)

    # Random intra-graph edges (edge_index is [2, E], source -> target).
    src_list, dst_list = [], []
    for g in range(num_graphs):
        ks, kd = jax.random.split(jax.random.fold_in(k_e1, g))
        src_list.append(jax.random.randint(ks, (edges_per_graph,), 0,
                                           nodes_per_graph) + g * nodes_per_graph)
        dst_list.append(jax.random.randint(kd, (edges_per_graph,), 0,
                                           nodes_per_graph) + g * nodes_per_graph)
    edge_index = jnp.stack([jnp.concatenate(src_list), jnp.concatenate(dst_list)])

    # batch[n] = graph id of node n.
    batch = jnp.repeat(jnp.arange(num_graphs), nodes_per_graph)

    # Parameters (GCNConv1: F->128, GCNConv2: 128->64, fc: 64->C).
    w1 = glorot(k_w1, (num_node_features, 128))
    b1 = jnp.zeros((1, 128), jnp.float32)
    w2 = glorot(k_w2, (128, 64))
    b2 = jnp.zeros((1, 64), jnp.float32)
    wfc = glorot(k_wfc, (64, num_classes))
    bfc = jax.random.uniform(k_bfc, (1, num_classes), jnp.float32,
                             -1.0 / 8.0, 1.0 / 8.0)

    a_hat = build_norm_adj(edge_index, N)
    pool_mat = build_pool_matrix(batch, num_graphs)

    out = gcn_model_pallas(a_hat, x, w1, b1, w2, b2, pool_mat, wfc, bfc)
    out = jax.block_until_ready(out)

    ref = reference_forward(a_hat, x, w1, b1, w2, b2, pool_mat, wfc, bfc)
    assert out.shape == (num_graphs, num_classes)
    # bf16 streamed operands -> relaxed tolerance vs. the f32 reference.
    assert jnp.allclose(out, ref, atol=3e-2, rtol=3e-2), \
        f"max abs err {jnp.max(jnp.abs(out - ref))}"

    print("KERNEL_OK")
</pallas_src>

<mosaic_0001>
module attributes {stable_mosaic.version = 11 : i64} {
  func.func @conv1_kernel(%arg0: i32, %arg1: i32, %arg2: memref<128x128xbf16, #tpu.memory_space<vmem>>, %arg3: memref<128x16xbf16, #tpu.memory_space<vmem>>, %arg4: memref<16x128xbf16, #tpu.memory_space<vmem>>, %arg5: memref<1x128xf32, #tpu.memory_space<vmem>>, %arg6: memref<128x64xbf16, #tpu.memory_space<vmem>>, %arg7: memref<128x64xbf16, #tpu.memory_space<vmem>>, %arg8: memref<128x16xf32, #tpu.memory_space<vmem>>) attributes {dimension_semantics = [#tpu.dimension_semantics<parallel>, #tpu.dimension_semantics<arbitrary>], iteration_bounds = array<i64: 2, 2>, scalar_prefetch = 0 : i64, scratch_operands = 1 : i64, tpu.core_type = #tpu.core_type<tc>, window_params = [{transform_indices = @transform_0, window_bounds = array<i64: 128, 128>}, {transform_indices = @transform_1, window_bounds = array<i64: 128, 16>}, {pipeline_mode = #tpu.pipeline_mode<synchronous>, transform_indices = @transform_2, window_bounds = array<i64: 16, 128>}, {pipeline_mode = #tpu.pipeline_mode<synchronous>, transform_indices = @transform_3, window_bounds = array<i64: 1, 128>}, {pipeline_mode = #tpu.pipeline_mode<synchronous>, transform_indices = @transform_4, window_bounds = array<i64: 128, 64>}, {transform_indices = @transform_5, window_bounds = array<i64: 128, 64>}]} {
    %c0_i32 = arith.constant 0 : i32
    %0 = arith.cmpi eq, %arg1, %c0_i32 : i32
    %1 = arith.extui %0 : i1 to i32
    %c0_i32_0 = arith.constant 0 : i32
    %2 = arith.cmpi ne, %1, %c0_i32_0 : i32
    scf.if %2 {
      %cst_9 = arith.constant 0.000000e+00 : f32
      %12 = vector.broadcast %cst_9 : f32 to vector<128x16xf32>
      %c0_10 = arith.constant 0 : index
      %c0_11 = arith.constant 0 : index
      %13 = vector.load %arg8[%c0_10, %c0_11] : memref<128x16xf32, #tpu.memory_space<vmem>>, vector<128x16xf32>
      tpu.vector_store %arg8[%c0_10, %c0_11], %12 {strides = array<i32>} : memref<128x16xf32, #tpu.memory_space<vmem>>, vector<128x16xf32>,
    } else {
    }
    %c0 = arith.constant 0 : index
    %c0_1 = arith.constant 0 : index
    %3 = vector.load %arg8[%c0, %c0_1] : memref<128x16xf32, #tpu.memory_space<vmem>>, vector<128x16xf32>
    %c0_2 = arith.constant 0 : index
    %c0_3 = arith.constant 0 : index
    %4 = vector.load %arg2[%c0_2, %c0_3] : memref<128x128xbf16, #tpu.memory_space<vmem>>, vector<128x128xbf16>
    %c0_4 = arith.constant 0 : index
    %c0_5 = arith.constant 0 : index
    %5 = vector.load %arg3[%c0_4, %c0_5] : memref<128x16xbf16, #tpu.memory_space<vmem>>, vector<128x16xbf16>
    %cst = arith.constant dense<0.000000e+00> : vector<128x16xf32>
    %6 = tpu.matmul %4, %5, %cst {dimension_numbers = #tpu.dot_dimension_numbers<[1], [0], [0], [1], [0, 0, 1, 1], [], []>} : vector<128x128xbf16>, vector<128x16xbf16>, vector<128x16xf32> -> vector<128x16xf32>
    %7 = arith.addf %3, %6 : vector<128x16xf32>
    %c0_6 = arith.constant 0 : index
    %c0_7 = arith.constant 0 : index
    %8 = vector.load %arg8[%c0_6, %c0_7] : memref<128x16xf32, #tpu.memory_space<vmem>>, vector<128x16xf32>
    tpu.vector_store %arg8[%c0_6, %c0_7], %7 {strides = array<i32>} : memref<128x16xf32, #tpu.memory_space<vmem>>, vector<128x16xf32>,
    %c1_i32 = arith.constant 1 : i32
    %9 = arith.cmpi eq, %arg1, %c1_i32 : i32
    %10 = arith.extui %9 : i1 to i32
    %c0_i32_8 = arith.constant 0 : i32
    %11 = arith.cmpi ne, %10, %c0_i32_8 : i32
    scf.if %11 {
      %c0_9 = arith.constant 0 : index
      %c0_10 = arith.constant 0 : index
      %12 = vector.load %arg8[%c0_9, %c0_10] : memref<128x16xf32, #tpu.memory_space<vmem>>, vector<128x16xf32>
      %13 = arith.truncf %12 : vector<128x16xf32> to vector<128x16xbf16>
      %c0_11 = arith.constant 0 : index
      %c0_12 = arith.constant 0 : index
      %14 = vector.load %arg4[%c0_11, %c0_12] : memref<16x128xbf16, #tpu.memory_space<vmem>>, vector<16x128xbf16>
      %cst_13 = arith.constant dense<0.000000e+00> : vector<128x128xf32>
      %15 = tpu.matmul %13, %14, %cst_13 {dimension_numbers = #tpu.dot_dimension_numbers<[1], [0], [0], [1], [0, 0, 1, 1], [], []>} : vector<128x16xbf16>, vector<16x128xbf16>, vector<128x128xf32> -> vector<128x128xf32>
      %c0_14 = arith.constant 0 : index
      %c0_15 = arith.constant 0 : index
      %16 = vector.load %arg5[%c0_14, %c0_15] : memref<1x128xf32, #tpu.memory_space<vmem>>, vector<1x128xf32>
      %17 = vector.broadcast %16 : vector<1x128xf32> to vector<128x128xf32>
      %18 = arith.addf %15, %17 : vector<128x128xf32>
      %cst_16 = arith.constant 0.000000e+00 : f32
      %19 = vector.broadcast %cst_16 : f32 to vector<128x128xf32>
      %20 = arith.maximumf %18, %19 : vector<128x128xf32>
      %21 = arith.truncf %20 : vector<128x128xf32> to vector<128x128xbf16>
      %c0_17 = arith.constant 0 : index
      %c0_18 = arith.constant 0 : index
      %22 = vector.load %arg6[%c0_17, %c0_18] : memref<128x64xbf16, #tpu.memory_space<vmem>>, vector<128x64xbf16>
      %cst_19 = arith.constant dense<0.000000e+00> : vector<128x64xf32>
      %23 = tpu.matmul %21, %22, %cst_19 {dimension_numbers = #tpu.dot_dimension_numbers<[1], [0], [0], [1], [0, 0, 1, 1], [], []>} : vector<128x128xbf16>, vector<128x64xbf16>, vector<128x64xf32> -> vector<128x64xf32>
      %24 = arith.truncf %23 : vector<128x64xf32> to vector<128x64xbf16>
      %c0_20 = arith.constant 0 : index
      %c0_21 = arith.constant 0 : index
      %25 = vector.load %arg7[%c0_20, %c0_21] : memref<128x64xbf16, #tpu.memory_space<vmem>>, vector<128x64xbf16>
      tpu.vector_store %arg7[%c0_20, %c0_21], %24 {strides = array<i32>} : memref<128x64xbf16, #tpu.memory_space<vmem>>, vector<128x64xbf16>,
    } else {
    }
    return
  }
  func.func @transform_0(%arg0: i32, %arg1: i32) -> (i32, i32) {
    %c0_i32 = arith.constant 0 : i32
    return %arg0, %arg1 : i32, i32
  }
  func.func @transform_1(%arg0: i32, %arg1: i32) -> (i32, i32) {
    %c0_i32 = arith.constant 0 : i32
    %c0_i32_0 = arith.constant 0 : i32
    return %arg1, %c0_i32 : i32, i32
  }
  func.func @transform_2(%arg0: i32, %arg1: i32) -> (i32, i32) {
    %c0_i32 = arith.constant 0 : i32
    %c0_i32_0 = arith.constant 0 : i32
    %c0_i32_1 = arith.constant 0 : i32
    return %c0_i32, %c0_i32_0 : i32, i32
  }
  func.func @transform_3(%arg0: i32, %arg1: i32) -> (i32, i32) {
    %c0_i32 = arith.constant 0 : i32
    %c0_i32_0 = arith.constant 0 : i32
    %c0_i32_1 = arith.constant 0 : i32
    return %c0_i32, %c0_i32_0 : i32, i32
  }
  func.func @transform_4(%arg0: i32, %arg1: i32) -> (i32, i32) {
    %c0_i32 = arith.constant 0 : i32
    %c0_i32_0 = arith.constant 0 : i32
    %c0_i32_1 = arith.constant 0 : i32
    return %c0_i32, %c0_i32_0 : i32, i32
  }
  func.func @transform_5(%arg0: i32, %arg1: i32) -> (i32, i32) {
    %c0_i32 = arith.constant 0 : i32
    %c0_i32_0 = arith.constant 0 : i32
    return %arg0, %c0_i32 : i32, i32
  }
}

</mosaic_0001>

<llo_original>
// kernel: tpu_custom_call.1
$region0: #{tpu_custom_call.1}
  #allocation0 [shape = 'u32[]', space=smem, size = 0x4, offset = 0x4, fixed_abs, tag = 'smem constant byte address 0x4 - core index']
  #allocation1 [shape = 'u32[72,128]{1,0:T(1,128)}', space=vmem, size = 0x9000, scoped, tag = 'internal scratch']
  #allocation2 [shape = 'f32[128,16]{1,0:T(8,128)}', space=vmem, size = 0x10000, scoped, tag = 'scratch operand']
  %s0 = inlined_call_operand.hbm [shape: bf16[256,256], index: 0, kind: input, shape index: {}]
  %s1 = inlined_call_operand.vmem [shape: bf16[256,16], index: 1, kind: input, shape index: {}]
  %s2 = inlined_call_operand.vmem [shape: bf16[16,128], index: 2, kind: input, shape index: {}]
  %s3 = inlined_call_operand.vmem [shape: f32[1,128], index: 3, kind: input, shape index: {}]
  %s4 = inlined_call_operand.vmem [shape: bf16[128,64], index: 4, kind: input, shape index: {}]
  %s5 = inlined_call_operand.vmem [shape: bf16[256,64], index: 5, kind: output, shape index: {}]
  %s6 = sld [smem:[#allocation0]]
  $region65: #{tpu_custom_call.1} parent=0
    _
  %s8 = ssub.s32 1, %s6
  %s9 = scalar_select 0, %s8, %s6
  $region1: #{tpu_custom_call.1} parent=0
    #allocation3 [shape = 'u8[65536]{0}', space=vmem, size = 0x10000, scoped, tag = 'input window, operand 0']
    #allocation4 [shape = 's32[2]{0}', space=sflag, size = 0x8, scoped, tag = 'scoped memory for tpu_custom_call.1']
    %10 = vsyncpa [#allocation4], 0
    %s11 = scalar_lea.sflag [#allocation4], 1
    %12 = vsyncpa %s11, 0
    loop: start=0, step=1, limit=6
    $region2: #{tpu_custom_call.1} parent=1 // loop_pre_header
      _
    $region3: #{tpu_custom_call.1} parent=1 // loop_header
      %s14 = sphi 0, %s18
      %p15 = scmp.ge.s32.totalorder %s14, 6
      %s21 = sphi 0, %s33
      %s22 = sphi 0, %s29
      %s23 = sphi 0, %s21
      %s24 = sphi 0, %s22
      %s25 = sphi 0, %s23
      %s26 = sphi 0, %s24
      %s38 = sphi 0, %s40
      %s41 = sphi 0, %s38
      %s42 = sphi 0, %s41
      %s58 = sphi 0, %s42
      %s64 = sphi 0, %s66
      %s67 = sphi 0, %s64
      %s68 = sphi 0, %s67
      %s84 = sphi 0, %s68
      %s88 = sphi 0, %s88
      %s90 = sphi 0, %s88
      %s91 = sphi 0, %s90
      %s105 = sphi 0, %s91
      %s109 = sphi 0, %s109
      %s111 = sphi 0, %s109
      %s112 = sphi 0, %s111
      %s126 = sphi 0, %s112
      %s130 = sphi 0, %s130
      %s132 = sphi 0, %s130
      %s133 = sphi 0, %s132
      %s147 = sphi 0, %s133
      %s153 = sphi 0, %s155
      %s156 = sphi 0, %s153
      %s157 = sphi 0, %s156
      %s173 = sphi 0, %s157
    $region4: #{tpu_custom_call.1} parent=1 // loop_header_branch
      %17 = sbr.rel (%p15) target = $region8
    $region5: #{tpu_custom_call.1} parent=1 // loop_body
      %s19 = ssub.s32 %s14, 1
      %s20 = ssub.s32 %s14, 2
      %s27 = sadd.s32 1, %s22
      %p28 = scmp.ge.s32.totalorder %s27, 2
      %s29 = scalar_select %p28, 0, %s27
      %s30 = sadd.s32 1, %s21
      %s31 = scalar_select %p28, %s30, %s21
      %p32 = scmp.ge.s32.totalorder %s31, 2
      %s33 = scalar_select %p32, 0, %s31
      %s34 = ssub.s32 %s21, %s33
      %s35 = ssub.s32 %s22, %s29
      %s36 = sor.u32 %s34, %s35
      %p37 = scmp.eq.s32.totalorder %s36, 0
      %s39 = sadd.s32 %s38, 1
      %s40 = scalar_select %p37, %s38, %s39
      %p43 = pneg %p37
      %p44 = scmp.eq.s32.totalorder %s14, 3
      %p45 = por %p43, %p44
      %p46 = scmp.ne.s32.totalorder %s38, %s41
      %p47 = scmp.eq.s32.totalorder %s14, 0
      %p48 = por %p46, %p47
      %p49 = scmp.ne.s32.totalorder %s38, %s41
      %p50 = scmp.eq.s32.totalorder %s19, 3
      %p51 = por %p49, %p50
      %p52 = scmp.ne.s32.totalorder %s41, %s42
      %p53 = scmp.eq.s32.totalorder %s19, 0
      %p54 = por %p52, %p53
      %p55 = scmp.ne.s32.totalorder %s41, %s42
      %p56 = scmp.eq.s32.totalorder %s20, 3
      %p57 = por %p55, %p56
      %p59 = scmp.ne.s32.totalorder %s42, %s58
      %p60 = scmp.eq.s32.totalorder %s20, 0
      %p61 = por %p59, %p60
      %s62 = ssub.s32 %s22, %s29
      %p63 = scmp.eq.s32.totalorder %s62, 0
      %s65 = sadd.s32 %s64, 1
      %s66 = scalar_select %p63, %s64, %s65
      %p69 = pneg %p63
      %p70 = scmp.eq.s32.totalorder %s14, 3
      %p71 = por %p69, %p70
      %p72 = scmp.ne.s32.totalorder %s64, %s67
      %p73 = scmp.eq.s32.totalorder %s14, 0
      %p74 = por %p72, %p73
      %p75 = scmp.ne.s32.totalorder %s64, %s67
      %p76 = scmp.eq.s32.totalorder %s19, 3
      %p77 = por %p75, %p76
      %p78 = scmp.ne.s32.totalorder %s67, %s68
      %p79 = scmp.eq.s32.totalorder %s19, 0
      %p80 = por %p78, %p79
      %p81 = scmp.ne.s32.totalorder %s67, %s68
      %p82 = scmp.eq.s32.totalorder %s20, 3
      %p83 = por %p81, %p82
      %p85 = scmp.ne.s32.totalorder %s68, %s84
      %p86 = scmp.eq.s32.totalorder %s20, 0
      %p87 = por %p85, %p86
      %s89 = sadd.s32 %s88, 1
      %p92 = scmp.eq.s32.totalorder %s14, 3
      %p93 = scmp.ne.s32.totalorder %s88, %s90
      %p94 = scmp.eq.s32.totalorder %s14, 0
      %p95 = por %p93, %p94
      %p96 = scmp.ne.s32.totalorder %s88, %s90
      %p97 = scmp.eq.s32.totalorder %s19, 3
      %p98 = por %p96, %p97
      %p99 = scmp.ne.s32.totalorder %s90, %s91
      %p100 = scmp.eq.s32.totalorder %s19, 0
      %p101 = por %p99, %p100
      %p102 = scmp.ne.s32.totalorder %s90, %s91
      %p103 = scmp.eq.s32.totalorder %s20, 3
      %p104 = por %p102, %p103
      %p106 = scmp.ne.s32.totalorder %s91, %s105
      %p107 = scmp.eq.s32.totalorder %s20, 0
      %p108 = por %p106, %p107
      %s110 = sadd.s32 %s109, 1
      %p113 = scmp.eq.s32.totalorder %s14, 3
      %p114 = scmp.ne.s32.totalorder %s109, %s111
      %p115 = scmp.eq.s32.totalorder %s14, 0
      %p116 = por %p114, %p115
      %p117 = scmp.ne.s32.totalorder %s109, %s111
      %p118 = scmp.eq.s32.totalorder %s19, 3
      %p119 = por %p117, %p118
      %p120 = scmp.ne.s32.totalorder %s111, %s112
      %p121 = scmp.eq.s32.totalorder %s19, 0
      %p122 = por %p120, %p121
      %p123 = scmp.ne.s32.totalorder %s111, %s112
      %p124 = scmp.eq.s32.totalorder %s20, 3
      %p125 = por %p123, %p124
      %p127 = scmp.ne.s32.totalorder %s112, %s126
      %p128 = scmp.eq.s32.totalorder %s20, 0
      %p129 = por %p127, %p128
      %s131 = sadd.s32 %s130, 1
      %p134 = scmp.eq.s32.totalorder %s14, 3
      %p135 = scmp.ne.s32.totalorder %s130, %s132
      %p136 = scmp.eq.s32.totalorder %s14, 0
      %p137 = por %p135, %p136
      %p138 = scmp.ne.s32.totalorder %s130, %s132
      %p139 = scmp.eq.s32.totalorder %s19, 3
      %p140 = por %p138, %p139
      %p141 = scmp.ne.s32.totalorder %s132, %s133
      %p142 = scmp.eq.s32.totalorder %s19, 0
      %p143 = por %p141, %p142
      %p144 = scmp.ne.s32.totalorder %s132, %s133
      %p145 = scmp.eq.s32.totalorder %s20, 3
      %p146 = por %p144, %p145
      %p148 = scmp.ne.s32.totalorder %s133, %s147
      %p149 = scmp.eq.s32.totalorder %s20, 0
      %p150 = por %p148, %p149
      %s151 = ssub.s32 %s21, %s33
      %p152 = scmp.eq.s32.totalorder %s151, 0
      %s154 = sadd.s32 %s153, 1
      %s155 = scalar_select %p152, %s153, %s154
      %p158 = pneg %p152
      %p159 = scmp.eq.s32.totalorder %s14, 3
      %p160 = por %p158, %p159
      %p161 = scmp.ne.s32.totalorder %s153, %s156
      %p162 = scmp.eq.s32.totalorder %s14, 0
      %p163 = por %p161, %p162
      %p164 = scmp.ne.s32.totalorder %s153, %s156
      %p165 = scmp.eq.s32.totalorder %s19, 3
      %p166 = por %p164, %p165
      %p167 = scmp.ne.s32.totalorder %s156, %s157
      %p168 = scmp.eq.s32.totalorder %s19, 0
      %p169 = por %p167, %p168
      %p170 = scmp.ne.s32.totalorder %s156, %s157
      %p171 = scmp.eq.s32.totalorder %s20, 3
      %p172 = por %p170, %p171
      %p174 = scmp.ne.s32.totalorder %s157, %s173
      %p175 = scmp.eq.s32.totalorder %s20, 0
      %p176 = por %p174, %p175
      %p177 = scmp.le.s32.totalorder 1, %s14
      %p178 = scmp.lt.s32.totalorder %s14, 5
      %p179 = pnand %p177, %p178
      %p180 = pneg %p179
      // Predicated region
      $region9: #{tpu_custom_call.1} parent=5 // pred_check
        _
      $region10: #{tpu_custom_call.1} parent=5 // pred_check_branch
        %182 = sbr.rel (%p179) target = $region12
      $region11: #{tpu_custom_call.1} parent=5 // pred_region
        %s183 = ssub.s32 %s14, 1
        // Predicated region
        $region13: #{tpu_custom_call.1} parent=11 // pred_check
          %p184 = pneg %p101
        $region14: #{tpu_custom_call.1} parent=11 // pred_check_branch
          %186 = sbr.rel (%p184) target = $region16
        $region15: #{tpu_custom_call.1} parent=11 // pred_region
          _
        $region16: #{tpu_custom_call.1} parent=11 // pred_fallthru
          _
        // Predicated region
        $region17: #{tpu_custom_call.1} parent=11 // pred_check
          %p187 = pneg %p122
        $region18: #{tpu_custom_call.1} parent=11 // pred_check_branch
          %189 = sbr.rel (%p187) target = $region20
        $region19: #{tpu_custom_call.1} parent=11 // pred_region
          _
        $region20: #{tpu_custom_call.1} parent=11 // pred_fallthru
          _
        // Predicated region
        $region21: #{tpu_custom_call.1} parent=11 // pred_check
          %p190 = pneg %p143
        $region22: #{tpu_custom_call.1} parent=11 // pred_check_branch
          %192 = sbr.rel (%p190) target = $region24
        $region23: #{tpu_custom_call.1} parent=11 // pred_region
          _
        $region24: #{tpu_custom_call.1} parent=11 // pred_fallthru
          _
      $region12: #{tpu_custom_call.1} parent=5 // pred_fallthru
        _
      %p193 = scmp.lt.s32.totalorder %s14, 4
      // Predicated region
      $region25: #{tpu_custom_call.1} parent=5 // pred_check
        %p194 = pneg %p193
      $region26: #{tpu_custom_call.1} parent=5 // pred_check_branch
        %196 = sbr.rel (%p194) target = $region28
      $region27: #{tpu_custom_call.1} parent=5 // pred_region
        // Predicated region
        $region29: #{tpu_custom_call.1} parent=27 // pred_check
          %p197 = pneg %p48
        $region30: #{tpu_custom_call.1} parent=27 // pred_check_branch
          %199 = sbr.rel (%p197) target = $region32
        $region31: #{tpu_custom_call.1} parent=27 // pred_region
          %s200 = sand.u32 %s38, 1
          %s201 = scalar_lea.sflag [#allocation4], %s200
          %s202 = sand.u32 %s38, 1
          %s203 = smul.addr %s202, 64
          %s204 = scalar_lea.vmem [#allocation3], %s203
          %s205 = smul.u32 16, %s21
          %207 = vsyncadd %s201, 0
          %s208 = smul.addr %s205, 2
          %s209 = sadd.s32 %s22, %s208
          %s210 = smul.addr %s209, 4
          %s211 = scalar_lea.hbm %s0, %s210
          %s212 = sshll.u32 %s211, 4
          %s213 = int_to_ptr.hbm [resolvable:$true] %s212
          %s214 = sshll.u32 %s204, 4
          %s215 = int_to_ptr.vmem [resolvable:$true] %s214
          %220 = dma.hbm_to_vmem [thread:$0]  %s213, 1024, %s215, %s201, 128, 64, 4
        $region32: #{tpu_custom_call.1} parent=27 // pred_fallthru
          _
        // Predicated region
        $region33: #{tpu_custom_call.1} parent=27 // pred_check
          %p221 = pneg %p74
        $region34: #{tpu_custom_call.1} parent=27 // pred_check_branch
          %223 = sbr.rel (%p221) target = $region36
        $region35: #{tpu_custom_call.1} parent=27 // pred_region
          %s224 = smul.u32 16, %s22
          %p225 = scmp.lt.s32.totalorder %s224, 31
          %s226 = scalar_select %p225, %s224, 31
          %s227 = smul.addr %s226, 4
          %s228 = scalar_lea.vmem %s1, %s227
          %s229 = smul.u32 16, %s22
        $region36: #{tpu_custom_call.1} parent=27 // pred_fallthru
          _
      $region28: #{tpu_custom_call.1} parent=5 // pred_fallthru
        _
      %p230 = scmp.le.s32.totalorder 1, %s14
      %p231 = scmp.lt.s32.totalorder %s14, 5
      %p232 = pnand %p230, %p231
      %p233 = pneg %p232
      // Predicated region
      $region37: #{tpu_custom_call.1} parent=5 // pred_check
        _
      $region38: #{tpu_custom_call.1} parent=5 // pred_check_branch
        %235 = sbr.rel (%p232) target = $region40
      $region39: #{tpu_custom_call.1} parent=5 // pred_region
        %s236 = ssub.s32 %s14, 1
        %s237 = sand.u32 %s41, 1
        %s238 = scalar_lea.sflag [#allocation4], %s237
        %s239 = sand.u32 %s41, 1
        %s240 = smul.addr %s239, 64
        %s241 = scalar_lea.vmem [#allocation3], %s240
        // Predicated region
        $region41: #{tpu_custom_call.1} parent=39 // pred_check
          %p242 = pneg %p54
        $region42: #{tpu_custom_call.1} parent=39 // pred_check_branch
          %244 = sbr.rel (%p242) target = $region44
        $region43: #{tpu_custom_call.1} parent=39 // pred_region
          %246 = dma.done %s238, 1024
        $region44: #{tpu_custom_call.1} parent=39 // pred_fallthru
          _
        %s247 = sand.u32 %s41, 1
        %s248 = scalar_lea.sflag [#allocation4], %s247
        %s249 = sand.u32 %s41, 1
        %s250 = smul.addr %s249, 64
        %s251 = scalar_lea.vmem [#allocation3], %s250
        %p252 = pneg %p54
        %p253 = pneg %p51
        %s254 = smul.u32 16, %s24
        %p255 = scmp.lt.s32.totalorder %s254, 31
        %s256 = scalar_select %p255, %s254, 31
        %s257 = smul.addr %s256, 4
        %s258 = scalar_lea.vmem %s1, %s257
        %p259 = pneg %p80
        %p260 = pneg %p77
        %p261 = pneg %p101
        %p262 = pneg %p98
        %p263 = pneg %p122
        %p264 = pneg %p119
        %p265 = pneg %p143
        %p266 = pneg %p140
        %p267 = pneg %p169
        %p268 = pneg %p166
        %s269 = smul.u32 16, %s23
        %p270 = scmp.lt.s32.totalorder %s269, 31
        %s271 = scalar_select %p270, %s269, 31
        %s272 = smul.addr %s271, 4
        %s273 = scalar_lea.vmem %s5, %s272
        %s274 = smul.u32 16, %s23
        %s275 = smul.u32 16, %s24
        %p276 = scmp.lt.s32.totalorder %s275, 31
        %s277 = scalar_select %p276, %s275, 31
        %s278 = smul.addr %s277, 4
        %s279 = scalar_lea.vmem %s1, %s278
        %s280 = smul.u32 16, %s24
        %s281 = smul.u32 16, %s23
        %p282 = scmp.lt.s32.totalorder %s281, 31
        %s283 = scalar_select %p282, %s281, 31
        %s284 = smul.addr %s283, 4
        %s285 = scalar_lea.vmem %s5, %s284
        %s286 = smul.u32 16, %s23
        %p288 = scmp.eq.s32.totalorder %s24, 0
        // Predicated region
        $region45: #{tpu_custom_call.1} parent=39 // pred_check
          %p289 = pneg %p288
        $region46: #{tpu_custom_call.1} parent=39 // pred_check_branch
          %291 = sbr.rel (%p289) target = $region48
        $region47: #{tpu_custom_call.1} parent=39 // pred_region
          %vm292 = vcmask 130048
          %293 = vst.msk [vmem:[#allocation2] sm:$0xff] %vm292, 0.0
          %294 = vst.msk [vmem:[#allocation2 + $0x8] sm:$0xff] %vm292, 0.0
          %295 = vst.msk [vmem:[#allocation2 + $0x10] sm:$0xff] %vm292, 0.0
          %296 = vst.msk [vmem:[#allocation2 + $0x18] sm:$0xff] %vm292, 0.0
          %297 = vst.msk [vmem:[#allocation2 + $0x20] sm:$0xff] %vm292, 0.0
          %298 = vst.msk [vmem:[#allocation2 + $0x28] sm:$0xff] %vm292, 0.0
          %299 = vst.msk [vmem:[#allocation2 + $0x30] sm:$0xff] %vm292, 0.0
          %300 = vst.msk [vmem:[#allocation2 + $0x38] sm:$0xff] %vm292, 0.0
          %301 = vst.msk [vmem:[#allocation2 + $0x40] sm:$0xff] %vm292, 0.0
          %302 = vst.msk [vmem:[#allocation2 + $0x48] sm:$0xff] %vm292, 0.0
          %303 = vst.msk [vmem:[#allocation2 + $0x50] sm:$0xff] %vm292, 0.0
          %304 = vst.msk [vmem:[#allocation2 + $0x58] sm:$0xff] %vm292, 0.0
          %305 = vst.msk [vmem:[#allocation2 + $0x60] sm:$0xff] %vm292, 0.0
          %306 = vst.msk [vmem:[#allocation2 + $0x68] sm:$0xff] %vm292, 0.0
          %307 = vst.msk [vmem:[#allocation2 + $0x70] sm:$0xff] %vm292, 0.0
          %308 = vst.msk [vmem:[#allocation2 + $0x78] sm:$0xff] %vm292, 0.0
        $region48: #{tpu_custom_call.1} parent=39 // pred_fallthru
          _
        %v309 = vld [vmem:[#allocation2] sm:$0xff]
        %v310 = vld [vmem:[#allocation2 + $0x8] sm:$0xff]
        %v311 = vld [vmem:[#allocation2 + $0x10] sm:$0xff]
        %v312 = vld [vmem:[#allocation2 + $0x18] sm:$0xff]
        %v313 = vld [vmem:[#allocation2 + $0x20] sm:$0xff]
        %v314 = vld [vmem:[#allocation2 + $0x28] sm:$0xff]
        %v315 = vld [vmem:[#allocation2 + $0x30] sm:$0xff]
        %v316 = vld [vmem:[#allocation2 + $0x38] sm:$0xff]
        %v317 = vld [vmem:[#allocation2 + $0x40] sm:$0xff]
        %v318 = vld [vmem:[#allocation2 + $0x48] sm:$0xff]
        %v319 = vld [vmem:[#allocation2 + $0x50] sm:$0xff]
        %v320 = vld [vmem:[#allocation2 + $0x58] sm:$0xff]
        %v321 = vld [vmem:[#allocation2 + $0x60] sm:$0xff]
        %v322 = vld [vmem:[#allocation2 + $0x68] sm:$0xff]
        %v323 = vld [vmem:[#allocation2 + $0x70] sm:$0xff]
        %v324 = vld [vmem:[#allocation2 + $0x78] sm:$0xff]
        %v325 = vld [vmem:[%s241] sm:$0xf]
        %v326 = vld [vmem:[%s241 + $0x4] sm:$0xf]
        %v327 = vld [vmem:[%s241 + $0x8] sm:$0xf]
        %v328 = vld [vmem:[%s241 + $0xc] sm:$0xf]
        %v329 = vld [vmem:[%s241 + $0x10] sm:$0xf]
        %v330 = vld [vmem:[%s241 + $0x14] sm:$0xf]
        %v331 = vld [vmem:[%s241 + $0x18] sm:$0xf]
        %v332 = vld [vmem:[%s241 + $0x1c] sm:$0xf]
        %v333 = vld [vmem:[%s241 + $0x20] sm:$0xf]
        %v334 = vld [vmem:[%s241 + $0x24] sm:$0xf]
        %v335 = vld [vmem:[%s241 + $0x28] sm:$0xf]
        %v336 = vld [vmem:[%s241 + $0x2c] sm:$0xf]
        %v337 = vld [vmem:[%s241 + $0x30] sm:$0xf]
        %v338 = vld [vmem:[%s241 + $0x34] sm:$0xf]
        %v339 = vld [vmem:[%s241 + $0x38] sm:$0xf]
        %v340 = vld [vmem:[%s241 + $0x3c] sm:$0xf]
        %v341 = vld [vmem:[%s279] sm:$0xf]
        %v342 = vld [vmem:[%s279 + $0x4] sm:$0xf]
        %v343 = vld [vmem:[%s279 + $0x8] sm:$0xf]
        %v344 = vld [vmem:[%s279 + $0xc] sm:$0xf]
        %v345 = vld [vmem:[%s279 + $0x10] sm:$0xf]
        %v346 = vld [vmem:[%s279 + $0x14] sm:$0xf]
        %v347 = vld [vmem:[%s279 + $0x18] sm:$0xf]
        %v348 = vld [vmem:[%s279 + $0x1c] sm:$0xf]
        %v349 = vld [vmem:[%s279 + $0x20] sm:$0xf]
        %v350 = vld [vmem:[%s279 + $0x24] sm:$0xf]
        %v351 = vld [vmem:[%s279 + $0x28] sm:$0xf]
        %v352 = vld [vmem:[%s279 + $0x2c] sm:$0xf]
        %v353 = vld [vmem:[%s279 + $0x30] sm:$0xf]
        %v354 = vld [vmem:[%s279 + $0x34] sm:$0xf]
        %v355 = vld [vmem:[%s279 + $0x38] sm:$0xf]
        %v356 = vld [vmem:[%s279 + $0x3c] sm:$0xf]
        %v373 = vunpack.c.l.b16 %v325
        %v374 = vunpack.c.l.b16 %v326
        %v375 = vunpack.c.l.b16 %v327
        %v376 = vunpack.c.l.b16 %v328
        %v377 = vunpack.c.l.b16 %v329
        %v378 = vunpack.c.l.b16 %v330
        %v379 = vunpack.c.l.b16 %v331
        %v380 = vunpack.c.l.b16 %v332
        %v381 = vunpack.c.l.b16 %v333
        %v382 = vunpack.c.l.b16 %v334
        %v383 = vunpack.c.l.b16 %v335
        %v384 = vunpack.c.l.b16 %v336
        %v385 = vunpack.c.l.b16 %v337
        %v386 = vunpack.c.l.b16 %v338
        %v387 = vunpack.c.l.b16 %v339
        %v388 = vunpack.c.l.b16 %v340
        %v389 = vpack.c.b16 %v374, %v373
        %v390 = vpack.c.b16 %v376, %v375
        %v391 = vpack.c.b16 %v378, %v377
        %v392 = vpack.c.b16 %v380, %v379
        %v393 = vpack.c.b16 %v382, %v381
        %v394 = vpack.c.b16 %v384, %v383
        %v395 = vpack.c.b16 %v386, %v385
        %v396 = vpack.c.b16 %v388, %v387
        %v421 = vunpack.c.l.b16 %v341
        %v422 = vunpack.c.l.b16 %v342
        %v423 = vunpack.c.l.b16 %v343
        %v424 = vunpack.c.l.b16 %v344
        %v425 = vunpack.c.l.b16 %v345
        %v426 = vunpack.c.l.b16 %v346
        %v427 = vunpack.c.l.b16 %v347
        %v428 = vunpack.c.l.b16 %v348
        %v429 = vunpack.c.l.b16 %v349
        %v430 = vunpack.c.l.b16 %v350
        %v431 = vunpack.c.l.b16 %v351
        %v432 = vunpack.c.l.b16 %v352
        %v433 = vunpack.c.l.b16 %v353
        %v434 = vunpack.c.l.b16 %v354
        %v435 = vunpack.c.l.b16 %v355
        %v436 = vunpack.c.l.b16 %v356
        %v437 = vpack.c.b16 %v422, %v421
        %v438 = vpack.c.b16 %v424, %v423
        %v439 = vpack.c.b16 %v426, %v425
        %v440 = vpack.c.b16 %v428, %v427
        %v441 = vpack.c.b16 %v430, %v429
        %v442 = vpack.c.b16 %v432, %v431
        %v443 = vpack.c.b16 %v434, %v433
        %v444 = vpack.c.b16 %v436, %v435
        %453 = vmatpush.bf16.msra.mxu0 %v444
        %454 = vmatpush.bf16.msra.mxu0 %v443
        %455 = vmatpush.bf16.msra.mxu0 %v442
        %456 = vmatpush.bf16.msra.mxu0 %v441
        %457 = vmatpush.bf16.msra.mxu0 %v440
        %458 = vmatpush.bf16.msra.mxu0 %v439
        %459 = vmatpush.bf16.msra.mxu0 %v438
        %460 = vmatpush.bf16.msra.mxu0 %v437
        %461 = vmatmul.bf16.gmra.mxu0 %v389
        %v462 = vpop.f32.mrf.mxu0
        %v463 = vadd.f32 0.0, %v462
        %v464 = vpop.f32.mrf.mxu0
        %v465 = vadd.f32 0.0, %v464
        %466 = vmatmul.bf16.gmra.mxu0 %v390
        %v467 = vpop.f32.mrf.mxu0
        %v468 = vadd.f32 0.0, %v467
        %v469 = vpop.f32.mrf.mxu0
        %v470 = vadd.f32 0.0, %v469
        %471 = vmatmul.bf16.gmra.mxu0 %v391
        %v472 = vpop.f32.mrf.mxu0
        %v473 = vadd.f32 0.0, %v472
        %v474 = vpop.f32.mrf.mxu0
        %v475 = vadd.f32 0.0, %v474
        %476 = vmatmul.bf16.gmra.mxu0 %v392
        %v477 = vpop.f32.mrf.mxu0
        %v478 = vadd.f32 0.0, %v477
        %v479 = vpop.f32.mrf.mxu0
        %v480 = vadd.f32 0.0, %v479
        %481 = vmatmul.bf16.gmra.mxu0 %v393
        %v482 = vpop.f32.mrf.mxu0
        %v483 = vadd.f32 0.0, %v482
        %v484 = vpop.f32.mrf.mxu0
        %v485 = vadd.f32 0.0, %v484
        %486 = vmatmul.bf16.gmra.mxu0 %v394
        %v487 = vpop.f32.mrf.mxu0
        %v488 = vadd.f32 0.0, %v487
        %v489 = vpop.f32.mrf.mxu0
        %v490 = vadd.f32 0.0, %v489
        %491 = vmatmul.bf16.gmra.mxu0 %v395
        %v492 = vpop.f32.mrf.mxu0
        %v493 = vadd.f32 0.0, %v492
        %v494 = vpop.f32.mrf.mxu0
        %v495 = vadd.f32 0.0, %v494
        %496 = vmatmul.bf16.gmra.mxu0 %v396
        %v497 = vpop.f32.mrf.mxu0
        %v498 = vadd.f32 0.0, %v497
        %v499 = vpop.f32.mrf.mxu0
        %v500 = vadd.f32 0.0, %v499
        %501 = vdwg.mxu0
        %v502 = vadd.f32 %v309, %v463
        %v503 = vadd.f32 %v310, %v465
        %v504 = vadd.f32 %v311, %v468
        %v505 = vadd.f32 %v312, %v470
        %v506 = vadd.f32 %v313, %v473
        %v507 = vadd.f32 %v314, %v475
        %v508 = vadd.f32 %v315, %v478
        %v509 = vadd.f32 %v316, %v480
        %v510 = vadd.f32 %v317, %v483
        %v511 = vadd.f32 %v318, %v485
        %v512 = vadd.f32 %v319, %v488
        %v513 = vadd.f32 %v320, %v490
        %v514 = vadd.f32 %v321, %v493
        %v515 = vadd.f32 %v322, %v495
        %v516 = vadd.f32 %v323, %v498
        %v517 = vadd.f32 %v324, %v500
        %vm518 = vcmask 130048
        %519 = vst.msk [vmem:[#allocation2] sm:$0xff] %vm518, %v502
        %520 = vst.msk [vmem:[#allocation2 + $0x8] sm:$0xff] %vm518, %v503
        %521 = vst.msk [vmem:[#allocation2 + $0x10] sm:$0xff] %vm518, %v504
        %522 = vst.msk [vmem:[#allocation2 + $0x18] sm:$0xff] %vm518, %v505
        %523 = vst.msk [vmem:[#allocation2 + $0x20] sm:$0xff] %vm518, %v506
        %524 = vst.msk [vmem:[#allocation2 + $0x28] sm:$0xff] %vm518, %v507
        %525 = vst.msk [vmem:[#allocation2 + $0x30] sm:$0xff] %vm518, %v508
        %526 = vst.msk [vmem:[#allocation2 + $0x38] sm:$0xff] %vm518, %v509
        %527 = vst.msk [vmem:[#allocation2 + $0x40] sm:$0xff] %vm518, %v510
        %528 = vst.msk [vmem:[#allocation2 + $0x48] sm:$0xff] %vm518, %v511
        %529 = vst.msk [vmem:[#allocation2 + $0x50] sm:$0xff] %vm518, %v512
        %530 = vst.msk [vmem:[#allocation2 + $0x58] sm:$0xff] %vm518, %v513
        %531 = vst.msk [vmem:[#allocation2 + $0x60] sm:$0xff] %vm518, %v514
        %532 = vst.msk [vmem:[#allocation2 + $0x68] sm:$0xff] %vm518, %v515
        %533 = vst.msk [vmem:[#allocation2 + $0x70] sm:$0xff] %vm518, %v516
        %534 = vst.msk [vmem:[#allocation2 + $0x78] sm:$0xff] %vm518, %v517
        %p535 = scmp.eq.s32.totalorder %s24, 1
        // Predicated region
        $region49: #{tpu_custom_call.1} parent=39 // pred_check
          %p536 = pneg %p535
        $region50: #{tpu_custom_call.1} parent=39 // pred_check_branch
          %538 = sbr.rel (%p536) target = $region52
        $region51: #{tpu_custom_call.1} parent=39 // pred_region
          %v539 = vld [vmem:[#allocation2] sm:$0xff]
          %v540 = vld [vmem:[#allocation2 + $0x8] sm:$0xff]
          %v541 = vld [vmem:[#allocation2 + $0x10] sm:$0xff]
          %v542 = vld [vmem:[#allocation2 + $0x18] sm:$0xff]
          %v543 = vld [vmem:[#allocation2 + $0x20] sm:$0xff]
          %v544 = vld [vmem:[#allocation2 + $0x28] sm:$0xff]
          %v545 = vld [vmem:[#allocation2 + $0x30] sm:$0xff]
          %v546 = vld [vmem:[#allocation2 + $0x38] sm:$0xff]
          %v547 = vld [vmem:[#allocation2 + $0x40] sm:$0xff]
          %v548 = vld [vmem:[#allocation2 + $0x48] sm:$0xff]
          %v549 = vld [vmem:[#allocation2 + $0x50] sm:$0xff]
          %v550 = vld [vmem:[#allocation2 + $0x58] sm:$0xff]
          %v551 = vld [vmem:[#allocation2 + $0x60] sm:$0xff]
          %v552 = vld [vmem:[#allocation2 + $0x68] sm:$0xff]
          %v553 = vld [vmem:[#allocation2 + $0x70] sm:$0xff]
          %v554 = vld [vmem:[#allocation2 + $0x78] sm:$0xff]
          %v555 = vpack.c.bf16 %v540, %v539
          %v556 = vpack.c.bf16 %v542, %v541
          %v557 = vpack.c.bf16 %v544, %v543
          %v558 = vpack.c.bf16 %v546, %v545
          %v559 = vpack.c.bf16 %v548, %v547
          %v560 = vpack.c.bf16 %v550, %v549
          %v561 = vpack.c.bf16 %v552, %v551
          %v562 = vpack.c.bf16 %v554, %v553
          %v563 = vld [vmem:[%s2] sm:$0xf]
          %v564 = vld [vmem:[%s2 + $0x4] sm:$0xf]
          %v565 = vld [vmem:[%s3] sm:$0x1]
          %v567 = vperm.slane %v565, 0
          %v571 = vunpack.c.l.b16 %v563
          %v572 = vunpack.c.l.b16 %v564
          %v573 = vpack.c.b16 %v572, %v571
          %v576 = vsel %vm518, %v555, 0
          %v579 = vsel %vm518, %v556, 0
          %v582 = vsel %vm518, %v557, 0
          %v585 = vsel %vm518, %v558, 0
          %v588 = vsel %vm518, %v559, 0
          %v591 = vsel %vm518, %v560, 0
          %v594 = vsel %vm518, %v561, 0
          %v597 = vsel %vm518, %v562, 0
          %599 = vmatpush.bf16.msra.mxu0 0
          %600 = vmatpush.bf16.msra.mxu0 0
          %601 = vmatpush.bf16.msra.mxu0 0
          %602 = vmatpush.bf16.msra.mxu0 0
          %603 = vmatpush.bf16.msra.mxu0 0
          %604 = vmatpush.bf16.msra.mxu0 0
          %605 = vmatpush.bf16.msra.mxu0 0
          %606 = vmatpush.bf16.msra.mxu0 %v573
          %607 = vmatmul.bf16.gmra.mxu0 %v576
          %v608 = vpop.f32.mrf.mxu0
          %v609 = vadd.f32 %v567, %v608
          %v610 = vpop.f32.mrf.mxu0
          %v611 = vadd.f32 %v567, %v610
          %612 = vmatmul.bf16.gmra.mxu0 %v579
          %v613 = vpop.f32.mrf.mxu0
          %v614 = vadd.f32 %v567, %v613
          %v615 = vpop.f32.mrf.mxu0
          %v616 = vadd.f32 %v567, %v615
          %617 = vmatmul.bf16.gmra.mxu0 %v582
          %v618 = vpop.f32.mrf.mxu0
          %v619 = vadd.f32 %v567, %v618
          %v620 = vpop.f32.mrf.mxu0
          %v621 = vadd.f32 %v567, %v620
          %622 = vmatmul.bf16.gmra.mxu0 %v585
          %v623 = vpop.f32.mrf.mxu0
          %v624 = vadd.f32 %v567, %v623
          %v625 = vpop.f32.mrf.mxu0
          %v626 = vadd.f32 %v567, %v625
          %627 = vmatmul.bf16.gmra.mxu0 %v588
          %v628 = vpop.f32.mrf.mxu0
          %v629 = vadd.f32 %v567, %v628
          %v630 = vpop.f32.mrf.mxu0
          %v631 = vadd.f32 %v567, %v630
          %632 = vmatmul.bf16.gmra.mxu0 %v591
          %v633 = vpop.f32.mrf.mxu0
          %v634 = vadd.f32 %v567, %v633
          %v635 = vpop.f32.mrf.mxu0
          %v636 = vadd.f32 %v567, %v635
          %637 = vmatmul.bf16.gmra.mxu0 %v594
          %v638 = vpop.f32.mrf.mxu0
          %v639 = vadd.f32 %v567, %v638
          %v640 = vpop.f32.mrf.mxu0
          %v641 = vadd.f32 %v567, %v640
          %642 = vmatmul.bf16.gmra.mxu0 %v597
          %v643 = vpop.f32.mrf.mxu0
          %v644 = vadd.f32 %v567, %v643
          %v645 = vpop.f32.mrf.mxu0
          %v646 = vadd.f32 %v567, %v645
          %647 = vdwg.mxu0
          %v648 = vmax.f32 %v609, 0.0
          %v649 = vmax.f32 %v611, 0.0
          %v650 = vmax.f32 %v614, 0.0
          %v651 = vmax.f32 %v616, 0.0
          %v652 = vmax.f32 %v619, 0.0
          %v653 = vmax.f32 %v621, 0.0
          %v654 = vmax.f32 %v624, 0.0
          %v655 = vmax.f32 %v626, 0.0
          %v656 = vmax.f32 %v629, 0.0
          %v657 = vmax.f32 %v631, 0.0
          %v658 = vmax.f32 %v634, 0.0
          %v659 = vmax.f32 %v636, 0.0
          %v660 = vmax.f32 %v639, 0.0
          %v661 = vmax.f32 %v641, 0.0
          %v662 = vmax.f32 %v644, 0.0
          %v663 = vmax.f32 %v646, 0.0
          %v664 = vpack.c.bf16 %v649, %v648
          %v665 = vpack.c.bf16 %v651, %v650
          %v666 = vpack.c.bf16 %v653, %v652
          %v667 = vpack.c.bf16 %v655, %v654
          %v668 = vpack.c.bf16 %v657, %v656
          %v669 = vpack.c.bf16 %v659, %v658
          %v670 = vpack.c.bf16 %v661, %v660
          %v671 = vpack.c.bf16 %v663, %v662
          %v672 = vld [vmem:[%s4] sm:$0xf]
          %v673 = vld [vmem:[%s4 + $0x4] sm:$0xf]
          %v674 = vld [vmem:[%s4 + $0x8] sm:$0xf]
          %v675 = vld [vmem:[%s4 + $0xc] sm:$0xf]
          %v676 = vld [vmem:[%s4 + $0x10] sm:$0xf]
          %v677 = vld [vmem:[%s4 + $0x14] sm:$0xf]
          %v678 = vld [vmem:[%s4 + $0x18] sm:$0xf]
          %v679 = vld [vmem:[%s4 + $0x1c] sm:$0xf]
          %v680 = vld [vmem:[%s4 + $0x20] sm:$0xf]
          %v681 = vld [vmem:[%s4 + $0x24] sm:$0xf]
          %v682 = vld [vmem:[%s4 + $0x28] sm:$0xf]
          %v683 = vld [vmem:[%s4 + $0x2c] sm:$0xf]
          %v684 = vld [vmem:[%s4 + $0x30] sm:$0xf]
          %v685 = vld [vmem:[%s4 + $0x34] sm:$0xf]
          %v686 = vld [vmem:[%s4 + $0x38] sm:$0xf]
          %v687 = vld [vmem:[%s4 + $0x3c] sm:$0xf]
          %v704 = vunpack.c.l.b16 %v672
          %v705 = vunpack.c.l.b16 %v673
          %v706 = vunpack.c.l.b16 %v674
          %v707 = vunpack.c.l.b16 %v675
          %v708 = vunpack.c.l.b16 %v676
          %v709 = vunpack.c.l.b16 %v677
          %v710 = vunpack.c.l.b16 %v678
          %v711 = vunpack.c.l.b16 %v679
          %v712 = vunpack.c.l.b16 %v680
          %v713 = vunpack.c.l.b16 %v681
          %v714 = vunpack.c.l.b16 %v682
          %v715 = vunpack.c.l.b16 %v683
          %v716 = vunpack.c.l.b16 %v684
          %v717 = vunpack.c.l.b16 %v685
          %v718 = vunpack.c.l.b16 %v686
          %v719 = vunpack.c.l.b16 %v687
          %v720 = vpack.c.b16 %v705, %v704
          %v721 = vpack.c.b16 %v707, %v706
          %v722 = vpack.c.b16 %v709, %v708
          %v723 = vpack.c.b16 %v711, %v710
          %v724 = vpack.c.b16 %v713, %v712
          %v725 = vpack.c.b16 %v715, %v714
          %v726 = vpack.c.b16 %v717, %v716
          %v727 = vpack.c.b16 %v719, %v718
          %736 = vmatpush.bf16.msra.mxu0 %v727
          %737 = vmatpush.bf16.msra.mxu0 %v726
          %738 = vmatpush.bf16.msra.mxu0 %v725
          %739 = vmatpush.bf16.msra.mxu0 %v724
          %740 = vmatpush.bf16.msra.mxu0 %v723
          %741 = vmatpush.bf16.msra.mxu0 %v722
          %742 = vmatpush.bf16.msra.mxu0 %v721
          %743 = vmatpush.bf16.msra.mxu0 %v720
          %744 = vmatmul.bf16.gmra.mxu0 %v664
          %v745 = vpop.f32.mrf.mxu0
          %v746 = vadd.f32 0.0, %v745
          %v747 = vpop.f32.mrf.mxu0
          %v748 = vadd.f32 0.0, %v747
          %749 = vmatmul.bf16.gmra.mxu0 %v665
          %v750 = vpop.f32.mrf.mxu0
          %v751 = vadd.f32 0.0, %v750
          %v752 = vpop.f32.mrf.mxu0
          %v753 = vadd.f32 0.0, %v752
          %754 = vmatmul.bf16.gmra.mxu0 %v666
          %v755 = vpop.f32.mrf.mxu0
          %v756 = vadd.f32 0.0, %v755
          %v757 = vpop.f32.mrf.mxu0
          %v758 = vadd.f32 0.0, %v757
          %759 = vmatmul.bf16.gmra.mxu0 %v667
          %v760 = vpop.f32.mrf.mxu0
          %v761 = vadd.f32 0.0, %v760
          %v762 = vpop.f32.mrf.mxu0
          %v763 = vadd.f32 0.0, %v762
          %764 = vmatmul.bf16.gmra.mxu0 %v668
          %v765 = vpop.f32.mrf.mxu0
          %v766 = vadd.f32 0.0, %v765
          %v767 = vpop.f32.mrf.mxu0
          %v768 = vadd.f32 0.0, %v767
          %769 = vmatmul.bf16.gmra.mxu0 %v669
          %v770 = vpop.f32.mrf.mxu0
          %v771 = vadd.f32 0.0, %v770
          %v772 = vpop.f32.mrf.mxu0
          %v773 = vadd.f32 0.0, %v772
          %774 = vmatmul.bf16.gmra.mxu0 %v670
          %v775 = vpop.f32.mrf.mxu0
          %v776 = vadd.f32 0.0, %v775
          %v777 = vpop.f32.mrf.mxu0
          %v778 = vadd.f32 0.0, %v777
          %779 = vmatmul.bf16.gmra.mxu0 %v671
          %v780 = vpop.f32.mrf.mxu0
          %v781 = vadd.f32 0.0, %v780
          %v782 = vpop.f32.mrf.mxu0
          %v783 = vadd.f32 0.0, %v782
          %784 = vdwg.mxu0
          %v785 = vpack.c.bf16 %v746, %v746
          %v786 = vpack.c.bf16 %v748, %v748
          %v787 = vpack.c.bf16 %v751, %v751
          %v788 = vpack.c.bf16 %v753, %v753
          %v789 = vpack.c.bf16 %v756, %v756
          %v790 = vpack.c.bf16 %v758, %v758
          %v791 = vpack.c.bf16 %v761, %v761
          %v792 = vpack.c.bf16 %v763, %v763
          %v793 = vpack.c.bf16 %v766, %v766
          %v794 = vpack.c.bf16 %v768, %v768
          %v795 = vpack.c.bf16 %v771, %v771
          %v796 = vpack.c.bf16 %v773, %v773
          %v797 = vpack.c.bf16 %v776, %v776
          %v798 = vpack.c.bf16 %v778, %v778
          %v799 = vpack.c.bf16 %v781, %v781
          %v800 = vpack.c.bf16 %v783, %v783
          %vm801 = vcmask 519168
          %802 = vst.msk [vmem:[%s285] sm:$0xf] %vm801, %v785
          %803 = vst.msk [vmem:[%s285 + $0x4] sm:$0xf] %vm801, %v786
          %804 = vst.msk [vmem:[%s285 + $0x8] sm:$0xf] %vm801, %v787
          %805 = vst.msk [vmem:[%s285 + $0xc] sm:$0xf] %vm801, %v788
          %806 = vst.msk [vmem:[%s285 + $0x10] sm:$0xf] %vm801, %v789
          %807 = vst.msk [vmem:[%s285 + $0x14] sm:$0xf] %vm801, %v790
          %808 = vst.msk [vmem:[%s285 + $0x18] sm:$0xf] %vm801, %v791
          %809 = vst.msk [vmem:[%s285 + $0x1c] sm:$0xf] %vm801, %v792
          %810 = vst.msk [vmem:[%s285 + $0x20] sm:$0xf] %vm801, %v793
          %811 = vst.msk [vmem:[%s285 + $0x24] sm:$0xf] %vm801, %v794
          %812 = vst.msk [vmem:[%s285 + $0x28] sm:$0xf] %vm801, %v795
          %813 = vst.msk [vmem:[%s285 + $0x2c] sm:$0xf] %vm801, %v796
          %814 = vst.msk [vmem:[%s285 + $0x30] sm:$0xf] %vm801, %v797
          %815 = vst.msk [vmem:[%s285 + $0x34] sm:$0xf] %vm801, %v798
          %816 = vst.msk [vmem:[%s285 + $0x38] sm:$0xf] %vm801, %v799
          %817 = vst.msk [vmem:[%s285 + $0x3c] sm:$0xf] %vm801, %v800
        $region52: #{tpu_custom_call.1} parent=39 // pred_fallthru
          _
        %s818 = smul.u32 16, %s23
        %p819 = scmp.lt.s32.totalorder %s818, 31
        %s820 = scalar_select %p819, %s818, 31
        %s821 = smul.addr %s820, 4
        %s822 = scalar_lea.vmem %s5, %s821
        // Predicated region
        $region53: #{tpu_custom_call.1} parent=39 // pred_check
          %p823 = pneg %p166
        $region54: #{tpu_custom_call.1} parent=39 // pred_check_branch
          %825 = sbr.rel (%p823) target = $region56
        $region55: #{tpu_custom_call.1} parent=39 // pred_region
          %s826 = smul.u32 16, %s23
        $region56: #{tpu_custom_call.1} parent=39 // pred_fallthru
          _
      $region40: #{tpu_custom_call.1} parent=5 // pred_fallthru
        _
      %p827 = scmp.le.s32.totalorder 2, %s14
      // Predicated region
      $region57: #{tpu_custom_call.1} parent=5 // pred_check
        %p828 = pneg %p827
      $region58: #{tpu_custom_call.1} parent=5 // pred_check_branch
        %830 = sbr.rel (%p828) target = $region60
      $region59: #{tpu_custom_call.1} parent=5 // pred_region
        %s831 = ssub.s32 %s14, 2
        // Predicated region
        $region61: #{tpu_custom_call.1} parent=59 // pred_check
          %p832 = pneg %p172
        $region62: #{tpu_custom_call.1} parent=59 // pred_check_branch
          %834 = sbr.rel (%p832) target = $region64
        $region63: #{tpu_custom_call.1} parent=59 // pred_region
          %s835 = smul.u32 16, %s25
          %p836 = scmp.lt.s32.totalorder %s835, 31
          %s837 = scalar_select %p836, %s835, 31
          %s838 = smul.addr %s837, 4
          %s839 = scalar_lea.vmem %s5, %s838
        $region64: #{tpu_custom_call.1} parent=59 // pred_fallthru
          _
      $region60: #{tpu_custom_call.1} parent=5 // pred_fallthru
        _
    $region6: #{tpu_custom_call.1} parent=1 // loop_footer
      %s18 = sadd.s32 1, %s14
    $region7: #{tpu_custom_call.1} parent=1 // loop_footer_branch
      %13 = sbr.rel target = $region3
    $region8: #{tpu_custom_call.1} parent=1 // loop_exit
      _
    %840 = vsyncpa [#allocation4], 1
    %s841 = scalar_lea.sflag [#allocation4], 1
    %842 = vsyncpa %s841, 1

</llo_original>
